<compile_context>
chip_gen: v7x
topology: tpu7x:2x2x1
jax: 0.10.0
libtpu: 0.0.40
codegen_flags: <defaults>
</compile_context>

<pallas_src>
import functools
import math

import jax
import jax.numpy as jnp
from jax import lax
from jax.experimental import pallas as pl
from jax.experimental.pallas import tpu as pltpu

_ROWS = 8  # f32 sublane count: granularity of one dense (8, d_model) store


def _onehot_embed_kernel(ids_ref, emb_ref, out_ref, *, scale, vocab):
    """Small-vocab path: gather rows via a one-hot matmul on the MXU."""
    # ids_ref : VMEM (T, 1) int32      token ids for this block
    # emb_ref : VMEM (vocab, d_model)  resident table (single-buffered)
    # out_ref : VMEM (T, d_model)      dense output slab
    T = out_ref.shape[0]
    ids = ids_ref[...]                                       # (T, 1)
    cols = lax.broadcasted_iota(jnp.int32, (T, vocab), 1)    # (T, vocab)
    onehot = (ids == cols).astype(jnp.float32)               # exact 0/1 values
    rows = jnp.dot(onehot, emb_ref[...].astype(jnp.float32),
                   preferred_element_type=jnp.float32)       # (T, d_model)
    # Scale applied after the dot (exact f32 VPU multiply).
    out_ref[...] = (rows * scale).astype(out_ref.dtype)


def _gather_embed_kernel(ids_ref, emb_ref, out_ref, *, scale, tokens_per_block,
                         unroll):
    """General path: scalar row gather, assembled into dense 8-row tiles."""
    # ids_ref : SMEM (n_pad,) int32    scalar-prefetched token ids
    # emb_ref : VMEM (vocab, d_model)  resident table (single-buffered)
    # out_ref : VMEM (T, d_model)      dense output slab
    base = pl.program_id(0) * tokens_per_block
    d_model = out_ref.shape[-1]
    # Constant sublane-index pattern used to place each gathered row into its
    # sublane of an (8, d_model) register tile (cheap VPU selects; keeps the
    # single vst slot fed with dense stores instead of masked 1-row stores).
    sub = lax.broadcasted_iota(jnp.int32, (_ROWS, d_model), 0)

    def body(g, carry):
        row0 = pl.multiple_of(g * _ROWS, _ROWS)
        tile = jnp.zeros((_ROWS, d_model), jnp.float32)
        for r in range(_ROWS):  # unrolled at trace time
            tok = ids_ref[base + row0 + r]
            row = emb_ref[pl.ds(tok, 1), :].astype(jnp.float32)   # (1, d_model)
            tile = jnp.where(sub == r,
                             jnp.broadcast_to(row, (_ROWS, d_model)), tile)
        out_ref[pl.ds(row0, _ROWS), :] = (tile * scale).astype(out_ref.dtype)
        return carry

    lax.fori_loop(0, tokens_per_block // _ROWS, body, 0, unroll=unroll)


def input_embedding(ids, emb_table, *, use_onehot=None):
    """ids: (B, S) int; emb_table: (vocab, d_model) -> (B, S, d_model)."""
    B, S = ids.shape
    vocab, d_model = emb_table.shape
    out_dtype = emb_table.dtype
    itemsize = jnp.dtype(out_dtype).itemsize
    n_tok = B * S
    scale = float(math.sqrt(d_model))  # Python float -> folds to an immediate

    if use_onehot is None:
        use_onehot = vocab <= 1024  # MXU one-hot gather is cheap at small vocab

    # ---- tokens per grid step: multiple of 8, sized for ~1 MiB output blocks
    T = (1 << 20) // max(1, d_model * itemsize)
    if use_onehot:
        # also bound the (T, vocab) f32 one-hot intermediate to ~4 MiB
        T = min(T, (4 << 20) // max(1, vocab * 4))
    T = int(max(_ROWS, min(2048, T)))
    T -= T % _ROWS
    n_pad_min = -(-n_tok // _ROWS) * _ROWS
    if n_pad_min <= T:
        T = n_pad_min
    n_blocks = -(-n_tok // T)
    n_pad = n_blocks * T

    # Clamp ids: VMEM reads have no runtime bounds check.
    flat_ids = jnp.clip(ids.reshape(n_tok).astype(jnp.int32), 0, vocab - 1)
    if n_pad != n_tok:
        flat_ids = jnp.pad(flat_ids, (0, n_pad - n_tok))  # pad with valid id 0

    # ---- explicit VMEM budget: 1x table (Buffered(1)) + 2x output block +
    #      id tiles + one-hot intermediate + headroom.
    vmem_budget = (vocab * d_model * itemsize            # resident table (x1)
                   + 2 * T * d_model * itemsize          # output double-buffer
                   + 2 * T * 4                           # id tiles
                   + (T * vocab * 4 if use_onehot else 0)
                   + (4 << 20))                          # headroom / scratch
    vmem_budget = int(max(16 << 20, min(vmem_budget, 128 << 20)))

    compiler_params = pltpu.CompilerParams(
        dimension_semantics=("parallel",),   # independent token blocks
        vmem_limit_bytes=vmem_budget,
    )
    # TODO(synk): on v7x confirm the token axis really shards across both
    # TensorCores (CORE_PARALLEL / core_map); the table is replicated per core.

    out_shape = jax.ShapeDtypeStruct((n_pad, d_model), out_dtype)

    if use_onehot:
        kernel = functools.partial(_onehot_embed_kernel, scale=scale, vocab=vocab)
        grid_spec = pltpu.PrefetchScalarGridSpec(
            num_scalar_prefetch=0,
            grid=(n_blocks,),
            in_specs=[
                pl.BlockSpec((T, 1), lambda i: (i, 0)),
                # Constant index_map -> copied once; single-buffer it.
                pl.BlockSpec((vocab, d_model), lambda i: (0, 0),
                             pipeline_mode=pl.Buffered(1)),
            ],
            out_specs=pl.BlockSpec((T, d_model), lambda i: (i, 0)),
        )
        out_flat = pl.pallas_call(
            kernel, out_shape=out_shape, grid_spec=grid_spec,
            compiler_params=compiler_params,
        )(flat_ids.reshape(n_pad, 1), emb_table)
    else:
        # TODO(synk): for tables larger than the per-core VMEM budget (v7x:
        # 64 MiB/TC) or decode-shaped calls with n_tok << vocab, switch to an
        # HBM-resident table (memory_space=pl.ANY) + per-row async-copy gather.
        # TODO(synk): for very long sequences, replace whole-array scalar
        # prefetch of ids with a per-block (T,) SMEM-tiled input.
        unroll = int(min(8, max(1, T // _ROWS)))
        kernel = functools.partial(_gather_embed_kernel, scale=scale,
                                   tokens_per_block=T, unroll=unroll)
        grid_spec = pltpu.PrefetchScalarGridSpec(
            num_scalar_prefetch=1,          # flat_ids -> SMEM
            grid=(n_blocks,),
            in_specs=[
                pl.BlockSpec((vocab, d_model), lambda i, _ids: (0, 0),
                             pipeline_mode=pl.Buffered(1)),
            ],
            out_specs=pl.BlockSpec((T, d_model), lambda i, _ids: (i, 0)),
        )
        out_flat = pl.pallas_call(
            kernel, out_shape=out_shape, grid_spec=grid_spec,
            compiler_params=compiler_params,
        )(flat_ids, emb_table)

    return out_flat[:n_tok].reshape(B, S, d_model)


if __name__ == "__main__":
    # Small deterministic setup consistent with the module's forward.
    d_model = 128
    vocab_size = 64
    batch, seq = 2, 8

    key = jax.random.PRNGKey(0)
    k_emb, k_ids = jax.random.split(key)
    emb_table = jax.random.normal(k_emb, (vocab_size, d_model), dtype=jnp.float32)
    ids = jax.random.randint(k_ids, (batch, seq), minval=0, maxval=vocab_size,
                             dtype=jnp.int32)

    ref = jnp.take(emb_table, ids, axis=0) * jnp.float32(math.sqrt(d_model))

    # Path 1 (auto for small vocab): one-hot MXU gather.
    out_mxu = jax.block_until_ready(input_embedding(ids, emb_table))
    assert out_mxu.shape == (batch, seq, d_model)
    assert jnp.allclose(out_mxu, ref, rtol=5e-3, atol=1e-3), "one-hot path mismatch"

    # Path 2 (large-vocab path, forced here): resident-table dense 8-row gather.
    out_gather = jax.block_until_ready(
        input_embedding(ids, emb_table, use_onehot=False))
    assert out_gather.shape == (batch, seq, d_model)
    assert jnp.allclose(out_gather, ref, rtol=1e-5, atol=1e-5), "gather path mismatch"

    print("KERNEL_OK")
</pallas_src>

<mosaic_0001>
module attributes {stable_mosaic.version = 11 : i64} {
  func.func @_onehot_embed_kernel(%arg0: i32, %arg1: memref<16x1xi32, #tpu.memory_space<vmem>>, %arg2: memref<64x128xf32, #tpu.memory_space<vmem>>, %arg3: memref<16x128xf32, #tpu.memory_space<vmem>>) attributes {dimension_semantics = [#tpu.dimension_semantics<parallel>], iteration_bounds = array<i64: 1>, scalar_prefetch = 0 : i64, scratch_operands = 0 : i64, tpu.core_type = #tpu.core_type<tc>, window_params = [{transform_indices = @transform_0, window_bounds = array<i64: 16, 1>}, {pipeline_mode = #tpu.pipeline_mode<synchronous>, transform_indices = @transform_1, window_bounds = array<i64: 64, 128>}, {transform_indices = @transform_2, window_bounds = array<i64: 16, 128>}]} {
    %c0 = arith.constant 0 : index
    %c0_0 = arith.constant 0 : index
    %0 = vector.load %arg1[%c0, %c0_0] : memref<16x1xi32, #tpu.memory_space<vmem>>, vector<16x1xi32>
    %1 = tpu.iota {dimensions = array<i32: 1>} : vector<16x64xi32>
    %2 = vector.broadcast %0 : vector<16x1xi32> to vector<16x64xi32>
    %3 = arith.cmpi eq, %2, %1 : vector<16x64xi32>
    %4 = arith.extui %3 : vector<16x64xi1> to vector<16x64xi32>
    %5 = arith.sitofp %4 : vector<16x64xi32> to vector<16x64xf32>
    %c0_1 = arith.constant 0 : index
    %c0_2 = arith.constant 0 : index
    %6 = vector.load %arg2[%c0_1, %c0_2] : memref<64x128xf32, #tpu.memory_space<vmem>>, vector<64x128xf32>
    %cst = arith.constant dense<0.000000e+00> : vector<16x128xf32>
    %7 = tpu.matmul %5, %6, %cst {dimension_numbers = #tpu.dot_dimension_numbers<[1], [0], [0], [1], [0, 0, 1, 1], [], []>} : vector<16x64xf32>, vector<64x128xf32>, vector<16x128xf32> -> vector<16x128xf32>
    %cst_3 = arith.constant 11.3137083 : f32
    %8 = vector.broadcast %cst_3 : f32 to vector<16x128xf32>
    %9 = arith.mulf %7, %8 : vector<16x128xf32>
    %c0_4 = arith.constant 0 : index
    %c0_5 = arith.constant 0 : index
    %10 = vector.load %arg3[%c0_4, %c0_5] : memref<16x128xf32, #tpu.memory_space<vmem>>, vector<16x128xf32>
    tpu.vector_store %arg3[%c0_4, %c0_5], %9 {strides = array<i32>} : memref<16x128xf32, #tpu.memory_space<vmem>>, vector<16x128xf32>,
    return
  }
  func.func @transform_0(%arg0: i32) -> (i32, i32) {
    %c0_i32 = arith.constant 0 : i32
    %c0_i32_0 = arith.constant 0 : i32
    return %arg0, %c0_i32 : i32, i32
  }
  func.func @transform_1(%arg0: i32) -> (i32, i32) {
    %c0_i32 = arith.constant 0 : i32
    %c0_i32_0 = arith.constant 0 : i32
    %c0_i32_1 = arith.constant 0 : i32
    return %c0_i32, %c0_i32_0 : i32, i32
  }
  func.func @transform_2(%arg0: i32) -> (i32, i32) {
    %c0_i32 = arith.constant 0 : i32
    %c0_i32_0 = arith.constant 0 : i32
    return %arg0, %c0_i32 : i32, i32
  }
}

</mosaic_0001>

<llo_original>
// kernel: tpu_custom_call.1
$region0: #{tpu_custom_call.1}
  #allocation0 [shape = 'u32[]', space=smem, size = 0x4, offset = 0x4, fixed_abs, tag = 'smem constant byte address 0x4 - core index']
  #allocation1 [shape = 'u32[144,128]{1,0:T(1,128)}', space=vmem, size = 0x12000, scoped, tag = 'internal scratch']
  %s0 = inlined_call_operand.vmem [shape: s32[16,1], index: 0, kind: input, shape index: {}]
  %s1 = inlined_call_operand.hbm [shape: f32[64,128], index: 1, kind: input, shape index: {}]
  %s2 = inlined_call_operand.hbm [shape: f32[16,128], index: 2, kind: output, shape index: {}]
  %s3 = sld [smem:[#allocation0]]
  $region22: #{tpu_custom_call.1} parent=0
    _
  %s5 = ssub.s32 1, %s3
  %s6 = scalar_select 0, %s5, %s3
  $region1: #{tpu_custom_call.1} parent=0
    #allocation2 [shape = 'u8[32768]{0}', space=vmem, size = 0x8000, scoped, tag = 'input window, operand 1, single buffered']
    #allocation3 [shape = 's32[1]{0}', space=sflag, size = 0x4, scoped, tag = 'scoped memory for tpu_custom_call.1']
    #allocation4 [shape = 's32[1]{0}', space=sflag, size = 0x4, scoped, tag = 'scoped memory for tpu_custom_call.1']
    #allocation5 [shape = 'u8[8192]{0}', space=vmem, size = 0x2000, scoped, tag = 'output window, operand 0, single buffered']
    %7 = vsyncpa [#allocation3], 0
    %8 = vsyncpa [#allocation4], 0
    // Predicated region
    $region2: #{tpu_custom_call.1} parent=1 // pred_check
      _
    $region3: #{tpu_custom_call.1} parent=1 // pred_check_branch
      %10 = sbr.rel (0) target = $region5
    $region4: #{tpu_custom_call.1} parent=1 // pred_region
      _
    $region5: #{tpu_custom_call.1} parent=1 // pred_fallthru
      _
    // Predicated region
    $region6: #{tpu_custom_call.1} parent=1 // pred_check
      _
    $region7: #{tpu_custom_call.1} parent=1 // pred_check_branch
      %12 = sbr.rel (0) target = $region9
    $region8: #{tpu_custom_call.1} parent=1 // pred_region
      %s14 = ssub.s32 1024, 1024
      %15 = vsyncadd [#allocation3], %s14
      %s16 = sshll.u32 [#allocation2], 4
      %s17 = int_to_ptr.vmem [resolvable:$true] %s16
      %22 = dma.hbm_to_vmem [thread:$0]  %s1, 1024, %s17, [#allocation3], 128, 128, 8
    $region9: #{tpu_custom_call.1} parent=1 // pred_fallthru
      _
    // Predicated region
    $region10: #{tpu_custom_call.1} parent=1 // pred_check
      _
    $region11: #{tpu_custom_call.1} parent=1 // pred_check_branch
      %24 = sbr.rel (0) target = $region13
    $region12: #{tpu_custom_call.1} parent=1 // pred_region
      %25 = dma.done [#allocation3], 1024
    $region13: #{tpu_custom_call.1} parent=1 // pred_fallthru
      _
    %v26 = vld [vmem:[%s0] sm:$0xff]
    %v27 = vld [vmem:[%s0 + $0x8] sm:$0xff]
    %v28 = vlaneseq
    %v29 = vand.u32 %v28, 127
    %30 = vset.pattern.permute.xlu0 0
    %31 = vperm.xlu0 %30, %v26
    %v32 = vpop.permute.xlu0 %31
    %33 = vset.pattern.permute.xlu0 0
    %34 = vperm.xlu0 %33, %v27
    %v35 = vpop.permute.xlu0 %34
    %vm36 = vcmp.eq.s32.totalorder %v32, %v29
    %vm37 = vcmp.eq.s32.totalorder %v35, %v29
    %v38 = vsel %vm36, 1, 0
    %v39 = vsel %vm37, 1, 0
    %v40 = vcvt.s32.f32 %v38
    %v41 = vcvt.s32.f32 %v39
    %v42 = vld [vmem:[#allocation2] sm:$0xff]
    %v43 = vld [vmem:[#allocation2 + $0x8] sm:$0xff]
    %v44 = vld [vmem:[#allocation2 + $0x10] sm:$0xff]
    %v45 = vld [vmem:[#allocation2 + $0x18] sm:$0xff]
    %v46 = vld [vmem:[#allocation2 + $0x20] sm:$0xff]
    %v47 = vld [vmem:[#allocation2 + $0x28] sm:$0xff]
    %v48 = vld [vmem:[#allocation2 + $0x30] sm:$0xff]
    %v49 = vld [vmem:[#allocation2 + $0x38] sm:$0xff]
    %vm50 = vcmask 523264
    %v52 = vsel %vm50, %v40, 0
    %v55 = vsel %vm50, %v41, 0
    %57 = vmatprep.subr.mxu0 0.0
    %58 = vmatpush1.msra.mxu0 %v42
    %59 = vmatprep.subr.mxu0 0.0
    %60 = vmatpush1.msra.mxu0 %v43
    %61 = vmatprep.subr.mxu0 0.0
    %62 = vmatpush1.msra.mxu0 %v44
    %63 = vmatprep.subr.mxu0 0.0
    %64 = vmatpush1.msra.mxu0 %v45
    %65 = vmatprep.subr.mxu0 0.0
    %66 = vmatpush1.msra.mxu0 %v46
    %67 = vmatprep.subr.mxu0 0.0
    %68 = vmatpush1.msra.mxu0 %v47
    %69 = vmatprep.subr.mxu0 0.0
    %70 = vmatpush1.msra.mxu0 %v48
    %71 = vmatprep.subr.mxu0 0.0
    %72 = vmatpush1.msra.mxu0 %v49
    %73 = vmatprep.subr.mxu0 0.0
    %74 = vmatpush1.msra.mxu0 0.0
    %75 = vmatprep.subr.mxu0 0.0
    %76 = vmatpush1.msra.mxu0 0.0
    %77 = vmatprep.subr.mxu0 0.0
    %78 = vmatpush1.msra.mxu0 0.0
    %79 = vmatprep.subr.mxu0 0.0
    %80 = vmatpush1.msra.mxu0 0.0
    %81 = vmatprep.subr.mxu0 0.0
    %82 = vmatpush1.msra.mxu0 0.0
    %83 = vmatprep.subr.mxu0 0.0
    %84 = vmatpush1.msra.mxu0 0.0
    %85 = vmatprep.subr.mxu0 0.0
    %86 = vmatpush1.msra.mxu0 0.0
    %87 = vmatprep.subr.mxu0 0.0
    %88 = vmatpush1.msra.mxu0 0.0
    %89 = vmatprep.subr.mxu0 0.0
    %90 = vmatpush1.msra.mxu0 0.0
    %91 = vmatprep.subr.mxu0 0.0
    %92 = vmatpush1.msra.mxu0 0.0
    %93 = vmatprep.subr.mxu0 0.0
    %94 = vmatpush1.msra.mxu0 0.0
    %95 = vmatprep.subr.mxu0 0.0
    %96 = vmatpush1.msra.mxu0 0.0
    %97 = vmatprep.subr.mxu0 0.0
    %98 = vmatpush1.msra.mxu0 0.0
    %99 = vmatprep.subr.mxu0 0.0
    %100 = vmatpush1.msra.mxu0 0.0
    %101 = vmatprep.subr.mxu0 0.0
    %102 = vmatpush1.msra.mxu0 0.0
    %103 = vmatprep.subr.mxu0 0.0
    %104 = vmatpush1.msra.mxu0 0.0
    %105 = vmatprep.subr.mxu0 0.0
    %106 = vmatpush1.msra.mxu0 0.0
    %107 = vmatprep.subr.mxu0 0.0
    %108 = vmatpush1.msra.mxu0 0.0
    %109 = vmatprep.subr.mxu0 0.0
    %110 = vmatpush1.msra.mxu0 0.0
    %111 = vmatprep.subr.mxu0 0.0
    %112 = vmatpush1.msra.mxu0 0.0
    %113 = vmatprep.subr.mxu0 0.0
    %114 = vmatpush1.msra.mxu0 0.0
    %115 = vmatprep.subr.mxu0 0.0
    %116 = vmatpush1.msra.mxu0 0.0
    %117 = vmatprep.subr.mxu0 0.0
    %118 = vmatpush1.msra.mxu0 0.0
    %119 = vmatprep.subr.mxu0 0.0
    %120 = vmatpush1.msra.mxu0 0.0
    %121 = vmatprep.mubr.f32.mxu0 0.0
    %122 = vmatmul.mubr.f32.gmra.mrb[0].mxu0 %v52
    %v123 = vpop.f32.mrb[0].mxu0
    %v124 = vadd.f32 0.0, %v123
    %v125 = vpop.f32.mrb[0].mxu0
    %126 = vmatprep.mubr.f32.mxu0 0.0
    %127 = vmatmul.mubr.f32.gmra.mrb[0].mxu0 %v55
    %v128 = vpop.f32.mrb[0].mxu0
    %v129 = vadd.f32 0.0, %v128
    %v130 = vpop.f32.mrb[0].mxu0
    %131 = vdwg.mxu0
    %v132 = vmul.f32 %v124, 11.313708
    %v133 = vmul.f32 %v129, 11.313708
    %134 = vst [vmem:[#allocation5] sm:$0xff] %v132
    %135 = vst [vmem:[#allocation5 + $0x8] sm:$0xff] %v133
    // Predicated region
    $region14: #{tpu_custom_call.1} parent=1 // pred_check
      _
    $region15: #{tpu_custom_call.1} parent=1 // pred_check_branch
      %137 = sbr.rel (0) target = $region17
    $region16: #{tpu_custom_call.1} parent=1 // pred_region
      %s139 = ssub.s32 256, 256
      %140 = vsyncadd [#allocation4], %s139
      %s141 = sshll.u32 [#allocation5], 4
      %s142 = int_to_ptr.vmem [resolvable:$true] %s141
      %147 = dma.vmem_to_hbm [thread:$0]  %s142, 256, %s2, [#allocation4], 128, 128, 8
    $region17: #{tpu_custom_call.1} parent=1 // pred_fallthru
      _
    // Predicated region
    $region18: #{tpu_custom_call.1} parent=1 // pred_check
      _
    $region19: #{tpu_custom_call.1} parent=1 // pred_check_branch
      %149 = sbr.rel (0) target = $region21
    $region20: #{tpu_custom_call.1} parent=1 // pred_region
      %150 = dma.done [#allocation4], 256
    $region21: #{tpu_custom_call.1} parent=1 // pred_fallthru
      _
    %151 = vsyncpa [#allocation3], 1
    %152 = vsyncpa [#allocation4], 1

</llo_original>
